<compile_context>
chip_gen: v5e
topology: v5e:2x2
jax: 0.10.0
libtpu: 0.0.40
codegen_flags: <defaults>
</compile_context>

<pallas_src>
import jax
import jax.numpy as jnp
from jax import lax
from jax.experimental import pallas as pl
from jax.experimental.pallas import tpu as pltpu


def _round_up(v, m):
    return -(-v // m) * m


def _make_linear_kernel(k_rem, acc_into_out):
    """Build the matmul+bias kernel.

    k_rem        : K % tk (0 => no in-kernel K-tail masking needed).
    acc_into_out : accumulate directly into the f32 output block instead of a
                   separate VMEM scratch accumulator.
    """

    def kernel(x_ref, w_ref, b_ref, o_ref, *scratch):
        acc = o_ref if acc_into_out else scratch[0]
        k = pl.program_id(2)
        nk = pl.num_programs(2)

        @pl.when(k == 0)
        def _init():
            # Fold the bias into the accumulator init (broadcast over rows).
            acc[...] = jnp.broadcast_to(b_ref[...].astype(acc.dtype), acc.shape)

        def accumulate(x_tile):
            acc[...] += jnp.dot(x_tile, w_ref[...],
                                preferred_element_type=jnp.float32)

        if k_rem:
            # K tail: zero the garbage columns of the last x tile so the
            # garbage rows of w never contribute.  Static Python branch; no
            # cost at all when K divides the tile.
            @pl.when(k == nk - 1)
            def _tail():
                col = lax.broadcasted_iota(jnp.int32, x_ref.shape, 1)
                xm = jnp.where(col < k_rem, x_ref[...], 0).astype(x_ref.dtype)
                accumulate(xm)

            @pl.when(k != nk - 1)
            def _body():
                accumulate(x_ref[...])
        else:
            accumulate(x_ref[...])

        if not acc_into_out:
            @pl.when(k == nk - 1)
            def _store():
                o_ref[...] = acc[...].astype(o_ref.dtype)

    return kernel


def _pick_tile(dim, cands):
    """Full-dim block for small axes; else minimize last-tile waste."""
    if dim <= cands[0]:
        return dim                       # block == full array dim is legal
    return min(cands, key=lambda t: (pl.cdiv(dim, t) * t - dim, -t))


def linear_new(x, w, b, *, operand_dtype=jnp.bfloat16,
               tm_max=512, tn_max=512, tk_max=1024):
    M, K = x.shape
    K2, N = w.shape
    assert K == K2 and b.shape == (N,)
    out_dtype = x.dtype

    # Feed the MXU bf16 operands (f32 accumulation in-kernel).  Pass
    # operand_dtype=None to keep the input dtype end-to-end.
    if operand_dtype is not None and x.dtype != operand_dtype:
        x_op = x.astype(operand_dtype)
        w_op = w.astype(operand_dtype)
    else:
        x_op, w_op = x, w
    b2 = b.reshape(1, N)

    # ---- tile selection (no wrapper-side padding) ----
    tm = _pick_tile(M, [tm_max, 256, 128])      # divisible by 8 or == M
    tn = _pick_tile(N, [tn_max, 256, 128])      # divisible by 128 or == N
    if K <= tk_max:
        tk = K                                  # full-dim block, no masking
    else:
        divs = [t for t in (tk_max, 512, 256) if K % t == 0]
        tk = divs[0] if divs else tk_max        # prefer exact divisor of K
    k_rem = K % tk

    gm, gn, gk = pl.cdiv(M, tm), pl.cdiv(N, tn), pl.cdiv(K, tk)

    # v7x megacore: avoid a single (i, j) grid point for medium shapes so both
    # TensorCores get work (harmless ~0.35us/step overhead elsewhere).
    if gm * gn == 1 and M >= 256:
        tm = _round_up(pl.cdiv(M, 2), 8)
        gm = pl.cdiv(M, tm)

    acc_into_out = out_dtype == jnp.float32
    op_bytes = x_op.dtype.itemsize
    out_bytes = jnp.dtype(out_dtype).itemsize

    # VMEM budget: double-buffered inputs + output block (+ f32 scratch).
    vmem_need = (2 * (tm * tk * op_bytes + tk * tn * op_bytes
                      + tn * b2.dtype.itemsize)
                 + 2 * tm * tn * out_bytes
                 + (0 if acc_into_out else tm * tn * 4))
    # Explicit limit; stays under ~48 MiB so v7x's 64 MiB per-TC VMEM keeps
    # headroom while v5e/v6e can exceed their 16/32 MiB scoped defaults.
    vmem_limit = int(min(48 * 1024 * 1024,
                         max(32 * 1024 * 1024, 2 * vmem_need)))

    cost = pl.CostEstimate(
        flops=2 * M * N * K,
        transcendentals=0,
        # x is re-streamed once per N tile, w once per M tile.
        bytes_accessed=(M * K * gn * op_bytes
                        + K * N * gm * op_bytes
                        + N * b2.dtype.itemsize
                        + M * N * out_bytes),
    )

    kernel = _make_linear_kernel(k_rem=k_rem, acc_into_out=acc_into_out)
    scratch_shapes = [] if acc_into_out else [pltpu.VMEM((tm, tn), jnp.float32)]

    # TODO(synk): on v5e, consider pipeline_mode=pl.Buffered(3) on the x/w
    # specs if profiles show exposed DMA at i/j tile boundaries.
    return pl.pallas_call(
        kernel,
        out_shape=jax.ShapeDtypeStruct((M, N), out_dtype),
        grid_spec=pltpu.PrefetchScalarGridSpec(
            num_scalar_prefetch=0,
            grid=(gm, gn, gk),
            in_specs=[
                pl.BlockSpec((tm, tk), lambda i, j, k: (i, k)),   # x
                pl.BlockSpec((tk, tn), lambda i, j, k: (k, j)),   # w
                pl.BlockSpec((1, tn), lambda i, j, k: (0, j)),    # b
            ],
            out_specs=pl.BlockSpec((tm, tn), lambda i, j, k: (i, j)),
            scratch_shapes=scratch_shapes,
        ),
        compiler_params=pltpu.CompilerParams(
            dimension_semantics=("parallel", "parallel", "arbitrary"),
            vmem_limit_bytes=vmem_limit,
        ),
        cost_estimate=cost,
    )(x_op, w_op, b2)


if __name__ == "__main__":
    # Small shapes consistent with the module: batch=16, features=64, hidden=128.
    batch, features, hidden = 16, 64, 128

    key = jax.random.PRNGKey(0)
    kx, kw, kb = jax.random.split(key, 3)
    # Deterministic init mirroring torch.rand (uniform [0, 1)).
    x = jax.random.uniform(kx, (batch, features), dtype=jnp.float32)
    w = jax.random.uniform(kw, (features, hidden), dtype=jnp.float32)
    b = jax.random.uniform(kb, (hidden,), dtype=jnp.float32)

    y = linear_new(x, w, b)
    jax.block_until_ready(y)

    # Reference built from the same bf16-rounded operands the kernel feeds the
    # MXU (f32 accumulation), so the comparison is apples-to-apples.
    xr = x.astype(jnp.bfloat16).astype(jnp.float32)
    wr = w.astype(jnp.bfloat16).astype(jnp.float32)
    y_ref = xr @ wr + b
    assert y.shape == y_ref.shape, "shape mismatch vs reference"
    assert jnp.allclose(y, y_ref, atol=1e-2, rtol=1e-2), "mismatch vs reference"

    print("KERNEL_OK")
</pallas_src>

<mosaic_0001>
module attributes {stable_mosaic.version = 11 : i64} {
  func.func @kernel(%arg0: i32, %arg1: i32, %arg2: i32, %arg3: memref<16x64xbf16, #tpu.memory_space<vmem>>, %arg4: memref<64x128xbf16, #tpu.memory_space<vmem>>, %arg5: memref<1x128xf32, #tpu.memory_space<vmem>>, %arg6: memref<16x128xf32, #tpu.memory_space<vmem>>) attributes {dimension_semantics = [#tpu.dimension_semantics<parallel>, #tpu.dimension_semantics<parallel>, #tpu.dimension_semantics<arbitrary>], iteration_bounds = array<i64: 1, 1, 1>, scalar_prefetch = 0 : i64, scratch_operands = 0 : i64, tpu.core_type = #tpu.core_type<tc>, window_params = [{transform_indices = @transform_0, window_bounds = array<i64: 16, 64>}, {transform_indices = @transform_1, window_bounds = array<i64: 64, 128>}, {transform_indices = @transform_2, window_bounds = array<i64: 1, 128>}, {transform_indices = @transform_3, window_bounds = array<i64: 16, 128>}]} {
    %c0_i32 = arith.constant 0 : i32
    %0 = arith.cmpi eq, %arg2, %c0_i32 : i32
    %1 = arith.extui %0 : i1 to i32
    %c0_i32_0 = arith.constant 0 : i32
    %2 = arith.cmpi ne, %1, %c0_i32_0 : i32
    scf.if %2 {
      %c0_8 = arith.constant 0 : index
      %c0_9 = arith.constant 0 : index
      %9 = vector.load %arg5[%c0_8, %c0_9] : memref<1x128xf32, #tpu.memory_space<vmem>>, vector<1x128xf32>
      %10 = vector.shape_cast %9 : vector<1x128xf32> to vector<1x128xf32>
      %11 = vector.broadcast %10 : vector<1x128xf32> to vector<16x128xf32>
      %c0_10 = arith.constant 0 : index
      %c0_11 = arith.constant 0 : index
      %12 = vector.load %arg6[%c0_10, %c0_11] : memref<16x128xf32, #tpu.memory_space<vmem>>, vector<16x128xf32>
      tpu.vector_store %arg6[%c0_10, %c0_11], %11 {strides = array<i32>} : memref<16x128xf32, #tpu.memory_space<vmem>>, vector<16x128xf32>,
    } else {
    }
    %c0 = arith.constant 0 : index
    %c0_1 = arith.constant 0 : index
    %3 = vector.load %arg3[%c0, %c0_1] : memref<16x64xbf16, #tpu.memory_space<vmem>>, vector<16x64xbf16>
    %c0_2 = arith.constant 0 : index
    %c0_3 = arith.constant 0 : index
    %4 = vector.load %arg6[%c0_2, %c0_3] : memref<16x128xf32, #tpu.memory_space<vmem>>, vector<16x128xf32>
    %c0_4 = arith.constant 0 : index
    %c0_5 = arith.constant 0 : index
    %5 = vector.load %arg4[%c0_4, %c0_5] : memref<64x128xbf16, #tpu.memory_space<vmem>>, vector<64x128xbf16>
    %cst = arith.constant dense<0.000000e+00> : vector<16x128xf32>
    %6 = tpu.matmul %3, %5, %cst {dimension_numbers = #tpu.dot_dimension_numbers<[1], [0], [0], [1], [0, 0, 1, 1], [], []>} : vector<16x64xbf16>, vector<64x128xbf16>, vector<16x128xf32> -> vector<16x128xf32>
    %7 = arith.addf %4, %6 : vector<16x128xf32>
    %c0_6 = arith.constant 0 : index
    %c0_7 = arith.constant 0 : index
    %8 = vector.load %arg6[%c0_6, %c0_7] : memref<16x128xf32, #tpu.memory_space<vmem>>, vector<16x128xf32>
    tpu.vector_store %arg6[%c0_6, %c0_7], %7 {strides = array<i32>} : memref<16x128xf32, #tpu.memory_space<vmem>>, vector<16x128xf32>,
    return
  }
  func.func @transform_0(%arg0: i32, %arg1: i32, %arg2: i32) -> (i32, i32) {
    %c0_i32 = arith.constant 0 : i32
    return %arg0, %arg2 : i32, i32
  }
  func.func @transform_1(%arg0: i32, %arg1: i32, %arg2: i32) -> (i32, i32) {
    %c0_i32 = arith.constant 0 : i32
    return %arg2, %arg1 : i32, i32
  }
  func.func @transform_2(%arg0: i32, %arg1: i32, %arg2: i32) -> (i32, i32) {
    %c0_i32 = arith.constant 0 : i32
    %c0_i32_0 = arith.constant 0 : i32
    return %c0_i32, %arg1 : i32, i32
  }
  func.func @transform_3(%arg0: i32, %arg1: i32, %arg2: i32) -> (i32, i32) {
    %c0_i32 = arith.constant 0 : i32
    return %arg0, %arg1 : i32, i32
  }
}

</mosaic_0001>

<llo_original>
// kernel: tpu_custom_call.1
$region0: #{tpu_custom_call.1}
  #allocation0 [shape = 'u32[]', space=smem, size = 0x4, offset = 0x4, fixed_abs, tag = 'smem constant byte address 0x4 - core index']
  #allocation1 [shape = 'u32[72,128]{1,0:T(1,128)}', space=vmem, size = 0x9000, scoped, tag = 'internal scratch']
  %s0 = inlined_call_operand.hbm [shape: bf16[16,64], index: 0, kind: input, shape index: {}]
  %s1 = inlined_call_operand.hbm [shape: bf16[64,128], index: 1, kind: input, shape index: {}]
  %s2 = inlined_call_operand.vmem [shape: f32[1,128], index: 2, kind: input, shape index: {}]
  %s3 = inlined_call_operand.hbm [shape: f32[16,128], index: 3, kind: output, shape index: {}]
  %s4 = sld [smem:[#allocation0]]
  $region34: #{tpu_custom_call.1} parent=0
    _
  %s6 = ssub.s32 1, %s4
  %s7 = scalar_select 0, %s6, %s4
  $region1: #{tpu_custom_call.1} parent=0
    #allocation2 [shape = 'u8[4096]{0}', space=vmem, size = 0x1000, scoped, tag = 'input window, operand 0, single buffered']
    #allocation3 [shape = 's32[1]{0}', space=sflag, size = 0x4, scoped, tag = 'scoped memory for tpu_custom_call.1']
    #allocation4 [shape = 's32[1]{0}', space=sflag, size = 0x4, scoped, tag = 'scoped memory for tpu_custom_call.1']
    #allocation5 [shape = 'u8[16384]{0}', space=vmem, size = 0x4000, scoped, tag = 'input window, operand 1, single buffered']
    #allocation6 [shape = 's32[1]{0}', space=sflag, size = 0x4, scoped, tag = 'scoped memory for tpu_custom_call.1']
    #allocation7 [shape = 'u8[8192]{0}', space=vmem, size = 0x2000, scoped, tag = 'output window, operand 0, single buffered']
    %8 = vsyncpa [#allocation3], 0
    %9 = vsyncpa [#allocation6], 0
    %10 = vsyncpa [#allocation4], 0
    // Predicated region
    $region2: #{tpu_custom_call.1} parent=1 // pred_check
      _
    $region3: #{tpu_custom_call.1} parent=1 // pred_check_branch
      %12 = sbr.rel (0) target = $region5
    $region4: #{tpu_custom_call.1} parent=1 // pred_region
      %14 = vsyncadd [#allocation3], 0
      %s15 = sshll.u32 %s0, 4
      %s16 = int_to_ptr.hbm [resolvable:$true] %s15
      %s17 = sshll.u32 [#allocation2], 4
      %s18 = int_to_ptr.vmem [resolvable:$true] %s17
      %23 = dma.hbm_to_vmem [thread:$0]  %s16, 128, %s18, [#allocation3], 64, 64, 4
    $region5: #{tpu_custom_call.1} parent=1 // pred_fallthru
      _
    // Predicated region
    $region6: #{tpu_custom_call.1} parent=1 // pred_check
      _
    $region7: #{tpu_custom_call.1} parent=1 // pred_check_branch
      %25 = sbr.rel (0) target = $region9
    $region8: #{tpu_custom_call.1} parent=1 // pred_region
      %27 = vsyncadd [#allocation6], 0
      %s28 = sshll.u32 %s1, 4
      %s29 = int_to_ptr.hbm [resolvable:$true] %s28
      %s30 = sshll.u32 [#allocation5], 4
      %s31 = int_to_ptr.vmem [resolvable:$true] %s30
      %36 = dma.hbm_to_vmem [thread:$0]  %s29, 512, %s31, [#allocation6], 64, 64, 4
    $region9: #{tpu_custom_call.1} parent=1 // pred_fallthru
      _
    // Predicated region
    $region10: #{tpu_custom_call.1} parent=1 // pred_check
      _
    $region11: #{tpu_custom_call.1} parent=1 // pred_check_branch
      %38 = sbr.rel (0) target = $region13
    $region12: #{tpu_custom_call.1} parent=1 // pred_region
      _
    $region13: #{tpu_custom_call.1} parent=1 // pred_fallthru
      _
    // Predicated region
    $region14: #{tpu_custom_call.1} parent=1 // pred_check
      _
    $region15: #{tpu_custom_call.1} parent=1 // pred_check_branch
      %40 = sbr.rel (0) target = $region17
    $region16: #{tpu_custom_call.1} parent=1 // pred_region
      %42 = dma.done [#allocation3], 128
    $region17: #{tpu_custom_call.1} parent=1 // pred_fallthru
      _
    // Predicated region
    $region18: #{tpu_custom_call.1} parent=1 // pred_check
      _
    $region19: #{tpu_custom_call.1} parent=1 // pred_check_branch
      %44 = sbr.rel (0) target = $region21
    $region20: #{tpu_custom_call.1} parent=1 // pred_region
      %46 = dma.done [#allocation6], 512
    $region21: #{tpu_custom_call.1} parent=1 // pred_fallthru
      _
    %p48 = scmp.eq.s32.totalorder 0, 0
    // Predicated region
    $region22: #{tpu_custom_call.1} parent=1 // pred_check
      %p49 = pneg %p48
    $region23: #{tpu_custom_call.1} parent=1 // pred_check_branch
      %51 = sbr.rel (%p49) target = $region25
    $region24: #{tpu_custom_call.1} parent=1 // pred_region
      %v52 = vld [vmem:[%s2] sm:$0x1]
      %v54 = vperm.slane %v52, 0
      %56 = vst [vmem:[#allocation7] sm:$0xff] %v54
      %57 = vst [vmem:[#allocation7 + $0x8] sm:$0xff] %v54
    $region25: #{tpu_custom_call.1} parent=1 // pred_fallthru
      _
    %v58 = vld [vmem:[#allocation2] sm:$0xf]
    %v59 = vld [vmem:[#allocation2 + $0x4] sm:$0xf]
    %v60 = vld [vmem:[#allocation7] sm:$0xff]
    %v61 = vld [vmem:[#allocation7 + $0x8] sm:$0xff]
    %v62 = vld [vmem:[#allocation5] sm:$0xf]
    %v63 = vld [vmem:[#allocation5 + $0x4] sm:$0xf]
    %v64 = vld [vmem:[#allocation5 + $0x8] sm:$0xf]
    %v65 = vld [vmem:[#allocation5 + $0xc] sm:$0xf]
    %v66 = vld [vmem:[#allocation5 + $0x10] sm:$0xf]
    %v67 = vld [vmem:[#allocation5 + $0x14] sm:$0xf]
    %v68 = vld [vmem:[#allocation5 + $0x18] sm:$0xf]
    %v69 = vld [vmem:[#allocation5 + $0x1c] sm:$0xf]
    %v72 = vunpack.c.l.b16 %v58
    %v73 = vunpack.c.l.b16 %v59
    %v74 = vpack.c.b16 %v73, %v72
    %v83 = vunpack.c.l.b16 %v62
    %v84 = vunpack.c.l.b16 %v63
    %v85 = vunpack.c.l.b16 %v64
    %v86 = vunpack.c.l.b16 %v65
    %v87 = vunpack.c.l.b16 %v66
    %v88 = vunpack.c.l.b16 %v67
    %v89 = vunpack.c.l.b16 %v68
    %v90 = vunpack.c.l.b16 %v69
    %v91 = vpack.c.b16 %v84, %v83
    %v92 = vpack.c.b16 %v86, %v85
    %v93 = vpack.c.b16 %v88, %v87
    %v94 = vpack.c.b16 %v90, %v89
    %vm99 = vcmask 523264
    %v101 = vsel %vm99, %v74, 0
    %103 = vmatpush.bf16.msra.mxu0 0
    %104 = vmatpush.bf16.msra.mxu0 0
    %105 = vmatpush.bf16.msra.mxu0 0
    %106 = vmatpush.bf16.msra.mxu0 0
    %107 = vmatpush.bf16.msra.mxu0 %v94
    %108 = vmatpush.bf16.msra.mxu0 %v93
    %109 = vmatpush.bf16.msra.mxu0 %v92
    %110 = vmatpush.bf16.msra.mxu0 %v91
    %111 = vmatmul.bf16.gmra.mxu0 %v101
    %v112 = vpop.f32.mrf.mxu0
    %v113 = vadd.f32 0.0, %v112
    %v114 = vpop.f32.mrf.mxu0
    %v115 = vadd.f32 0.0, %v114
    %116 = vdwg.mxu0
    %v117 = vadd.f32 %v60, %v113
    %v118 = vadd.f32 %v61, %v115
    %119 = vst [vmem:[#allocation7] sm:$0xff] %v117
    %120 = vst [vmem:[#allocation7 + $0x8] sm:$0xff] %v118
    // Predicated region
    $region26: #{tpu_custom_call.1} parent=1 // pred_check
      _
    $region27: #{tpu_custom_call.1} parent=1 // pred_check_branch
      %122 = sbr.rel (0) target = $region29
    $region28: #{tpu_custom_call.1} parent=1 // pred_region
      %124 = vsyncadd [#allocation4], 0
      %s125 = sshll.u32 [#allocation7], 4
      %s126 = int_to_ptr.vmem [resolvable:$true] %s125
      %s127 = sshll.u32 %s3, 4
      %s128 = int_to_ptr.hbm [resolvable:$true] %s127
      %133 = dma.vmem_to_hbm [thread:$0]  %s126, 256, %s128, [#allocation4], 128, 128, 8
    $region29: #{tpu_custom_call.1} parent=1 // pred_fallthru
      _
    // Predicated region
    $region30: #{tpu_custom_call.1} parent=1 // pred_check
      _
    $region31: #{tpu_custom_call.1} parent=1 // pred_check_branch
      %135 = sbr.rel (0) target = $region33
    $region32: #{tpu_custom_call.1} parent=1 // pred_region
      %137 = dma.done [#allocation4], 256
    $region33: #{tpu_custom_call.1} parent=1 // pred_fallthru
      _
    %138 = vsyncpa [#allocation3], 1
    %139 = vsyncpa [#allocation6], 1
    %140 = vsyncpa [#allocation4], 1

</llo_original>
